<compile_context>
chip_gen: v5e
topology: v5e:2x2
jax: 0.10.0
libtpu: 0.0.40
codegen_flags: <defaults>
</compile_context>

<pallas_src>
import functools

import jax
import jax.numpy as jnp
from jax.experimental import pallas as pl
from jax.experimental.pallas import tpu as pltpu


def _mlp_block_kernel(x_ref, g_ref, be_ref, w1_ref, b1_ref, w2_ref, b2_ref, o_ref):
    # x_ref: (TM, D) tile of rows (f32). Weights bf16, biases/affine f32.
    x = x_ref[...].astype(jnp.float32)
    D = x.shape[-1]
    inv_d = jnp.float32(1.0 / D)

    # --- LayerNorm over last dim (eps = 1e-5), fused single-pass statistics ---
    s = jnp.sum(x, axis=-1, keepdims=True)
    sq = jnp.sum(x * x, axis=-1, keepdims=True)
    mean = s * inv_d
    var = sq * inv_d - mean * mean          # biased variance, matches nn.LayerNorm
    xn = (x - mean) * jax.lax.rsqrt(var + 1e-5)
    xn = xn * g_ref[...] + be_ref[...]

    # --- fc1: bf16 operands on the MXU, f32 accumulation; exact erf GELU in f32 ---
    h = jnp.dot(
        xn.astype(jnp.bfloat16), w1_ref[...], preferred_element_type=jnp.float32
    ) + b1_ref[...]
    h = 0.5 * h * (1.0 + jax.lax.erf(h * jnp.float32(0.7071067811865476)))

    # --- fc2: bf16 operands, f32 accumulation ---
    y = jnp.dot(
        h.astype(jnp.bfloat16), w2_ref[...], preferred_element_type=jnp.float32
    ) + b2_ref[...]

    # --- residual add ---
    o_ref[...] = (x + y).astype(o_ref.dtype)


def _round_up(a, b):
    return (a + b - 1) // b * b


@functools.partial(jax.jit, static_argnames=("tm",))
def mlp_block(x, gamma, beta, w1, b1, w2, b2, *, tm=256):
    """x: (B, N, D) float32. Returns (B, N, D)."""
    B, N, D = x.shape
    H = w1.shape[1]
    M = B * N

    # Large row tile to feed the MXU; for tiny inputs shrink to a multiple of 8
    # so we don't pad a handful of rows up to 256.
    tm_eff = min(tm, _round_up(M, 8))
    m_pad = _round_up(M, tm_eff)

    x2 = x.reshape(M, D)
    if m_pad != M:
        # Zero rows are harmless: var + eps > 0, and padded outputs are sliced away.
        x2 = jnp.pad(x2, ((0, m_pad - M), (0, 0)))

    g2 = gamma.reshape(1, D).astype(jnp.float32)
    be2 = beta.reshape(1, D).astype(jnp.float32)
    b1_2 = b1.reshape(1, H).astype(jnp.float32)
    b2_2 = b2.reshape(1, D).astype(jnp.float32)
    # MXU operands in bf16; accumulation stays f32 inside the kernel.
    w1_bf = w1.astype(jnp.bfloat16)
    w2_bf = w2.astype(jnp.bfloat16)

    grid = (m_pad // tm_eff,)

    # Explicit VMEM budget: double-buffered x/out tiles + bf16 weights (x2 buffers)
    # + fc1 intermediate + LN temporaries, with headroom; capped well below v7x's
    # 64 MiB physical VMEM.
    vmem_bytes = (
        2 * tm_eff * D * 4          # x tile, double-buffered
        + 2 * tm_eff * D * 4        # out tile, double-buffered
        + 2 * 2 * D * H * 2         # W1 + W2, bf16, double-buffered
        + tm_eff * H * 4            # fc1 / GELU intermediate
        + 4 * tm_eff * D * 4        # LN temporaries, residual
        + (4 << 20)                 # slack for compiler scratch
    )
    vmem_limit = min(max(int(vmem_bytes * 1.5), 16 << 20), 48 << 20)

    cost = pl.CostEstimate(
        flops=4 * m_pad * D * H,                                   # two matmuls
        transcendentals=m_pad * H,                                 # erf per fc1 act
        bytes_accessed=2 * m_pad * D * 4 + 2 * D * H * 2 + (2 * D + H) * 4,
    )

    out = pl.pallas_call(
        _mlp_block_kernel,
        out_shape=jax.ShapeDtypeStruct((m_pad, D), x.dtype),
        grid_spec=pltpu.PrefetchScalarGridSpec(
            num_scalar_prefetch=0,
            grid=grid,
            in_specs=[
                pl.BlockSpec((tm_eff, D), lambda i: (i, 0)),  # x rows tile
                pl.BlockSpec((1, D), lambda i: (0, 0)),       # gamma
                pl.BlockSpec((1, D), lambda i: (0, 0)),       # beta
                pl.BlockSpec((D, H), lambda i: (0, 0)),       # W1 (bf16, full)
                pl.BlockSpec((1, H), lambda i: (0, 0)),       # b1
                pl.BlockSpec((H, D), lambda i: (0, 0)),       # W2 (bf16, full)
                pl.BlockSpec((1, D), lambda i: (0, 0)),       # b2
            ],
            out_specs=pl.BlockSpec((tm_eff, D), lambda i: (i, 0)),
        ),
        compiler_params=pltpu.CompilerParams(
            dimension_semantics=("parallel",),
            vmem_limit_bytes=vmem_limit,
        ),
        cost_estimate=cost,
    )(x2, g2, be2, w1_bf, b1_2, w2_bf, b2_2)

    return out[:M].reshape(B, N, D)


def _reference(x, gamma, beta, w1, b1, w2, b2):
    xn = (x - x.mean(-1, keepdims=True)) / jnp.sqrt(x.var(-1, keepdims=True) + 1e-5)
    xn = xn * gamma + beta
    h = xn @ w1 + b1
    h = 0.5 * h * (1.0 + jax.lax.erf(h / jnp.sqrt(2.0)))
    y = h @ w2 + b2
    return x + y


if __name__ == "__main__":
    # Small transformer-like shapes: batch=2, seq=8, dim=128, hidden=int(4*dim)=512
    B, N, D = 2, 8, 128
    H = int(D * 4.0)

    key = jax.random.PRNGKey(0)
    kx, k1, k2, k3, k4 = jax.random.split(key, 5)

    x = jax.random.normal(kx, (B, N, D), dtype=jnp.float32)

    gamma = jnp.ones((D,), jnp.float32)
    beta = jnp.zeros((D,), jnp.float32)
    w1 = jax.random.normal(k1, (D, H), dtype=jnp.float32) * 0.02
    b1 = jax.random.normal(k2, (H,), dtype=jnp.float32) * 0.02
    w2 = jax.random.normal(k3, (H, D), dtype=jnp.float32) * 0.02
    b2 = jax.random.normal(k4, (D,), dtype=jnp.float32) * 0.02

    out = mlp_block(x, gamma, beta, w1, b1, w2, b2)
    jax.block_until_ready(out)

    ref = _reference(x, gamma, beta, w1, b1, w2, b2)
    assert out.shape == (B, N, D)
    # bf16 MXU operands (f32 accumulation) -> relaxed tolerance vs the f32 reference.
    assert jnp.allclose(out, ref, atol=2e-2, rtol=2e-2), "mismatch vs reference"

    # Second check: row count not a multiple of 8/tm exercises the padding path.
    B2, N2 = 2, 13
    x_odd = jax.random.normal(kx, (B2, N2, D), dtype=jnp.float32)
    out_odd = mlp_block(x_odd, gamma, beta, w1, b1, w2, b2)
    jax.block_until_ready(out_odd)
    ref_odd = _reference(x_odd, gamma, beta, w1, b1, w2, b2)
    assert out_odd.shape == (B2, N2, D)
    assert jnp.allclose(out_odd, ref_odd, atol=2e-2, rtol=2e-2), "mismatch (padded)"

    print("KERNEL_OK")
</pallas_src>

<mosaic_0001>
module attributes {stable_mosaic.version = 11 : i64} {
  func.func @_mlp_block_kernel(%arg0: i32, %arg1: memref<16x128xf32, #tpu.memory_space<vmem>>, %arg2: memref<1x128xf32, #tpu.memory_space<vmem>>, %arg3: memref<1x128xf32, #tpu.memory_space<vmem>>, %arg4: memref<128x512xbf16, #tpu.memory_space<vmem>>, %arg5: memref<1x512xf32, #tpu.memory_space<vmem>>, %arg6: memref<512x128xbf16, #tpu.memory_space<vmem>>, %arg7: memref<1x128xf32, #tpu.memory_space<vmem>>, %arg8: memref<16x128xf32, #tpu.memory_space<vmem>>) attributes {dimension_semantics = [#tpu.dimension_semantics<parallel>], iteration_bounds = array<i64: 1>, scalar_prefetch = 0 : i64, scratch_operands = 0 : i64, tpu.core_type = #tpu.core_type<tc>, window_params = [{transform_indices = @transform_0, window_bounds = array<i64: 16, 128>}, {pipeline_mode = #tpu.pipeline_mode<synchronous>, transform_indices = @transform_1, window_bounds = array<i64: 1, 128>}, {pipeline_mode = #tpu.pipeline_mode<synchronous>, transform_indices = @transform_2, window_bounds = array<i64: 1, 128>}, {pipeline_mode = #tpu.pipeline_mode<synchronous>, transform_indices = @transform_3, window_bounds = array<i64: 128, 512>}, {pipeline_mode = #tpu.pipeline_mode<synchronous>, transform_indices = @transform_4, window_bounds = array<i64: 1, 512>}, {pipeline_mode = #tpu.pipeline_mode<synchronous>, transform_indices = @transform_5, window_bounds = array<i64: 512, 128>}, {pipeline_mode = #tpu.pipeline_mode<synchronous>, transform_indices = @transform_6, window_bounds = array<i64: 1, 128>}, {transform_indices = @transform_7, window_bounds = array<i64: 16, 128>}]} {
    %c0 = arith.constant 0 : index
    %c0_0 = arith.constant 0 : index
    %0 = vector.load %arg1[%c0, %c0_0] : memref<16x128xf32, #tpu.memory_space<vmem>>, vector<16x128xf32>
    %cst = arith.constant dense<0.000000e+00> : vector<16xf32>
    %1 = vector.multi_reduction <add>, %0, %cst [1] : vector<16x128xf32> to vector<16xf32>
    %2 = vector.shape_cast %1 : vector<16xf32> to vector<16x1xf32>
    %3 = arith.mulf %0, %0 : vector<16x128xf32>
    %cst_1 = arith.constant dense<0.000000e+00> : vector<16xf32>
    %4 = vector.multi_reduction <add>, %3, %cst_1 [1] : vector<16x128xf32> to vector<16xf32>
    %5 = vector.shape_cast %4 : vector<16xf32> to vector<16x1xf32>
    %cst_2 = arith.constant 7.812500e-03 : f32
    %6 = vector.broadcast %cst_2 : f32 to vector<16x1xf32>
    %7 = arith.mulf %2, %6 : vector<16x1xf32>
    %cst_3 = arith.constant 7.812500e-03 : f32
    %8 = vector.broadcast %cst_3 : f32 to vector<16x1xf32>
    %9 = arith.mulf %5, %8 : vector<16x1xf32>
    %10 = arith.mulf %7, %7 : vector<16x1xf32>
    %11 = arith.subf %9, %10 : vector<16x1xf32>
    %12 = vector.broadcast %7 : vector<16x1xf32> to vector<16x128xf32>
    %13 = arith.subf %0, %12 : vector<16x128xf32>
    %cst_4 = arith.constant 9.99999974E-6 : f32
    %14 = vector.broadcast %cst_4 : f32 to vector<16x1xf32>
    %15 = arith.addf %11, %14 : vector<16x1xf32>
    %16 = math.rsqrt %15 : vector<16x1xf32>
    %17 = vector.broadcast %16 : vector<16x1xf32> to vector<16x128xf32>
    %18 = arith.mulf %13, %17 : vector<16x128xf32>
    %c0_5 = arith.constant 0 : index
    %c0_6 = arith.constant 0 : index
    %19 = vector.load %arg2[%c0_5, %c0_6] : memref<1x128xf32, #tpu.memory_space<vmem>>, vector<1x128xf32>
    %20 = vector.broadcast %19 : vector<1x128xf32> to vector<16x128xf32>
    %21 = arith.mulf %18, %20 : vector<16x128xf32>
    %c0_7 = arith.constant 0 : index
    %c0_8 = arith.constant 0 : index
    %22 = vector.load %arg3[%c0_7, %c0_8] : memref<1x128xf32, #tpu.memory_space<vmem>>, vector<1x128xf32>
    %23 = vector.broadcast %22 : vector<1x128xf32> to vector<16x128xf32>
    %24 = arith.addf %21, %23 : vector<16x128xf32>
    %25 = arith.truncf %24 : vector<16x128xf32> to vector<16x128xbf16>
    %c0_9 = arith.constant 0 : index
    %c0_10 = arith.constant 0 : index
    %26 = vector.load %arg4[%c0_9, %c0_10] : memref<128x512xbf16, #tpu.memory_space<vmem>>, vector<128x512xbf16>
    %cst_11 = arith.constant dense<0.000000e+00> : vector<16x512xf32>
    %27 = tpu.matmul %25, %26, %cst_11 {dimension_numbers = #tpu.dot_dimension_numbers<[1], [0], [0], [1], [0, 0, 1, 1], [], []>} : vector<16x128xbf16>, vector<128x512xbf16>, vector<16x512xf32> -> vector<16x512xf32>
    %c0_12 = arith.constant 0 : index
    %c0_13 = arith.constant 0 : index
    %28 = vector.load %arg5[%c0_12, %c0_13] : memref<1x512xf32, #tpu.memory_space<vmem>>, vector<1x512xf32>
    %29 = vector.broadcast %28 : vector<1x512xf32> to vector<16x512xf32>
    %30 = arith.addf %27, %29 : vector<16x512xf32>
    %cst_14 = arith.constant 5.000000e-01 : f32
    %31 = vector.broadcast %cst_14 : f32 to vector<16x512xf32>
    %32 = arith.mulf %31, %30 : vector<16x512xf32>
    %cst_15 = arith.constant 0.707106769 : f32
    %33 = vector.broadcast %cst_15 : f32 to vector<16x512xf32>
    %34 = arith.mulf %30, %33 : vector<16x512xf32>
    %35 = math.erf %34 : vector<16x512xf32>
    %cst_16 = arith.constant 1.000000e+00 : f32
    %36 = vector.broadcast %cst_16 : f32 to vector<16x512xf32>
    %37 = arith.addf %36, %35 : vector<16x512xf32>
    %38 = arith.mulf %32, %37 : vector<16x512xf32>
    %39 = arith.truncf %38 : vector<16x512xf32> to vector<16x512xbf16>
    %c0_17 = arith.constant 0 : index
    %c0_18 = arith.constant 0 : index
    %40 = vector.load %arg6[%c0_17, %c0_18] : memref<512x128xbf16, #tpu.memory_space<vmem>>, vector<512x128xbf16>
    %cst_19 = arith.constant dense<0.000000e+00> : vector<16x128xf32>
    %41 = tpu.matmul %39, %40, %cst_19 {dimension_numbers = #tpu.dot_dimension_numbers<[1], [0], [0], [1], [0, 0, 1, 1], [], []>} : vector<16x512xbf16>, vector<512x128xbf16>, vector<16x128xf32> -> vector<16x128xf32>
    %c0_20 = arith.constant 0 : index
    %c0_21 = arith.constant 0 : index
    %42 = vector.load %arg7[%c0_20, %c0_21] : memref<1x128xf32, #tpu.memory_space<vmem>>, vector<1x128xf32>
    %43 = vector.broadcast %42 : vector<1x128xf32> to vector<16x128xf32>
    %44 = arith.addf %41, %43 : vector<16x128xf32>
    %45 = arith.addf %0, %44 : vector<16x128xf32>
    %c0_22 = arith.constant 0 : index
    %c0_23 = arith.constant 0 : index
    %46 = vector.load %arg8[%c0_22, %c0_23] : memref<16x128xf32, #tpu.memory_space<vmem>>, vector<16x128xf32>
    tpu.vector_store %arg8[%c0_22, %c0_23], %45 {strides = array<i32>} : memref<16x128xf32, #tpu.memory_space<vmem>>, vector<16x128xf32>,
    return
  }
  func.func @transform_0(%arg0: i32) -> (i32, i32) {
    %c0_i32 = arith.constant 0 : i32
    %c0_i32_0 = arith.constant 0 : i32
    return %arg0, %c0_i32 : i32, i32
  }
  func.func @transform_1(%arg0: i32) -> (i32, i32) {
    %c0_i32 = arith.constant 0 : i32
    %c0_i32_0 = arith.constant 0 : i32
    %c0_i32_1 = arith.constant 0 : i32
    return %c0_i32, %c0_i32_0 : i32, i32
  }
  func.func @transform_2(%arg0: i32) -> (i32, i32) {
    %c0_i32 = arith.constant 0 : i32
    %c0_i32_0 = arith.constant 0 : i32
    %c0_i32_1 = arith.constant 0 : i32
    return %c0_i32, %c0_i32_0 : i32, i32
  }
  func.func @transform_3(%arg0: i32) -> (i32, i32) {
    %c0_i32 = arith.constant 0 : i32
    %c0_i32_0 = arith.constant 0 : i32
    %c0_i32_1 = arith.constant 0 : i32
    return %c0_i32, %c0_i32_0 : i32, i32
  }
  func.func @transform_4(%arg0: i32) -> (i32, i32) {
    %c0_i32 = arith.constant 0 : i32
    %c0_i32_0 = arith.constant 0 : i32
    %c0_i32_1 = arith.constant 0 : i32
    return %c0_i32, %c0_i32_0 : i32, i32
  }
  func.func @transform_5(%arg0: i32) -> (i32, i32) {
    %c0_i32 = arith.constant 0 : i32
    %c0_i32_0 = arith.constant 0 : i32
    %c0_i32_1 = arith.constant 0 : i32
    return %c0_i32, %c0_i32_0 : i32, i32
  }
  func.func @transform_6(%arg0: i32) -> (i32, i32) {
    %c0_i32 = arith.constant 0 : i32
    %c0_i32_0 = arith.constant 0 : i32
    %c0_i32_1 = arith.constant 0 : i32
    return %c0_i32, %c0_i32_0 : i32, i32
  }
  func.func @transform_7(%arg0: i32) -> (i32, i32) {
    %c0_i32 = arith.constant 0 : i32
    %c0_i32_0 = arith.constant 0 : i32
    return %arg0, %c0_i32 : i32, i32
  }
}

</mosaic_0001>

<llo_original>
// kernel: mlp_block.1
$region0: #{mlp_block.1}
  #allocation0 [shape = 'u32[]', space=smem, size = 0x4, offset = 0x4, fixed_abs, tag = 'smem constant byte address 0x4 - core index']
  #allocation1 [shape = 'u32[72,128]{1,0:T(1,128)}', space=vmem, size = 0x9000, scoped, tag = 'internal scratch']
  %s0 = inlined_call_operand.vmem [shape: f32[16,128], index: 0, kind: input, shape index: {}]
  %s1 = inlined_call_operand.vmem [shape: f32[1,128], index: 1, kind: input, shape index: {}]
  %s2 = inlined_call_operand.vmem [shape: f32[1,128], index: 2, kind: input, shape index: {}]
  %s3 = inlined_call_operand.vmem [shape: bf16[128,512], index: 3, kind: input, shape index: {}]
  %s4 = inlined_call_operand.vmem [shape: f32[1,512], index: 4, kind: input, shape index: {}]
  %s5 = inlined_call_operand.vmem [shape: bf16[512,128], index: 5, kind: input, shape index: {}]
  %s6 = inlined_call_operand.vmem [shape: f32[1,128], index: 6, kind: input, shape index: {}]
  %s7 = inlined_call_operand.hbm [shape: f32[16,128], index: 7, kind: output, shape index: {}]
  %s8 = sld [smem:[#allocation0]]
  $region38: #{mlp_block.1} parent=0
    _
  %s10 = ssub.s32 1, %s8
  %s11 = scalar_select 0, %s10, %s8
  $region1: #{mlp_block.1} parent=0
    #allocation2 [shape = 'u8[8192]{0}', space=vmem, size = 0x2000, scoped, tag = 'output window, operand 0, single buffered']
    #allocation3 [shape = 's32[1]{0}', space=sflag, size = 0x4, scoped, tag = 'scoped memory for mlp_block.1']
    %12 = vsyncpa [#allocation3], 0
    // Predicated region
    $region2: #{mlp_block.1} parent=1 // pred_check
      _
    $region3: #{mlp_block.1} parent=1 // pred_check_branch
      %14 = sbr.rel (0) target = $region5
    $region4: #{mlp_block.1} parent=1 // pred_region
      _
    $region5: #{mlp_block.1} parent=1 // pred_fallthru
      _
    // Predicated region
    $region6: #{mlp_block.1} parent=1 // pred_check
      _
    $region7: #{mlp_block.1} parent=1 // pred_check_branch
      %16 = sbr.rel (0) target = $region9
    $region8: #{mlp_block.1} parent=1 // pred_region
      _
    $region9: #{mlp_block.1} parent=1 // pred_fallthru
      _
    // Predicated region
    $region10: #{mlp_block.1} parent=1 // pred_check
      _
    $region11: #{mlp_block.1} parent=1 // pred_check_branch
      %18 = sbr.rel (0) target = $region13
    $region12: #{mlp_block.1} parent=1 // pred_region
      _
    $region13: #{mlp_block.1} parent=1 // pred_fallthru
      _
    // Predicated region
    $region14: #{mlp_block.1} parent=1 // pred_check
      _
    $region15: #{mlp_block.1} parent=1 // pred_check_branch
      %20 = sbr.rel (0) target = $region17
    $region16: #{mlp_block.1} parent=1 // pred_region
      _
    $region17: #{mlp_block.1} parent=1 // pred_fallthru
      _
    // Predicated region
    $region18: #{mlp_block.1} parent=1 // pred_check
      _
    $region19: #{mlp_block.1} parent=1 // pred_check_branch
      %22 = sbr.rel (0) target = $region21
    $region20: #{mlp_block.1} parent=1 // pred_region
      _
    $region21: #{mlp_block.1} parent=1 // pred_fallthru
      _
    // Predicated region
    $region22: #{mlp_block.1} parent=1 // pred_check
      _
    $region23: #{mlp_block.1} parent=1 // pred_check_branch
      %24 = sbr.rel (0) target = $region25
    $region24: #{mlp_block.1} parent=1 // pred_region
      _
    $region25: #{mlp_block.1} parent=1 // pred_fallthru
      _
    // Predicated region
    $region26: #{mlp_block.1} parent=1 // pred_check
      _
    $region27: #{mlp_block.1} parent=1 // pred_check_branch
      %26 = sbr.rel (0) target = $region29
    $region28: #{mlp_block.1} parent=1 // pred_region
      _
    $region29: #{mlp_block.1} parent=1 // pred_fallthru
      _
    %v27 = vld [vmem:[%s0] sm:$0xff]
    %v28 = vld [vmem:[%s0 + $0x8] sm:$0xff]
    %29 = vadd.xlane.f32.xlu0 %v27
    %v30 = vpop.xlane.xlu0 %29
    %31 = vadd.xlane.f32.xlu0 %v28
    %v32 = vpop.xlane.xlu0 %31
    %v33 = vmul.f32 %v27, %v27
    %v34 = vmul.f32 %v28, %v28
    %35 = vadd.xlane.f32.xlu0 %v33
    %v36 = vpop.xlane.xlu0 %35
    %37 = vadd.xlane.f32.xlu0 %v34
    %v38 = vpop.xlane.xlu0 %37
    %v39 = vmul.f32 %v30, 0.0078125
    %v40 = vmul.f32 %v32, 0.0078125
    %v41 = vmul.f32 %v36, 0.0078125
    %v42 = vmul.f32 %v38, 0.0078125
    %v43 = vmul.f32 %v39, %v39
    %v44 = vmul.f32 %v40, %v40
    %v45 = vsub.f32 %v41, %v43
    %v46 = vsub.f32 %v42, %v44
    %v47 = vsub.f32 %v27, %v39
    %v48 = vsub.f32 %v28, %v40
    %v49 = vadd.f32 %v45, 1e-05
    %v50 = vadd.f32 %v46, 1e-05
    %v51 = vrsqrt.pop %v49
    %v52 = vmul.f32 %v51, %v49
    %v53 = vmul.f32 %v52, %v51
    %v54 = vmul.f32 0.5, %v53
    %v55 = vsub.f32 1.5, %v54
    %v56 = vmul.f32 %v51, %v55
    %vm57 = vweird.f32 %v49
    %vm58 = vweird.f32 %v51
    %vm59 = vmor %vm57, %vm58
    %v60 = vsel %vm59, %v51, %v56
    %v61 = vrsqrt.pop %v50
    %v62 = vmul.f32 %v61, %v50
    %v63 = vmul.f32 %v62, %v61
    %v64 = vmul.f32 0.5, %v63
    %v65 = vsub.f32 1.5, %v64
    %v66 = vmul.f32 %v61, %v65
    %vm67 = vweird.f32 %v50
    %vm68 = vweird.f32 %v61
    %vm69 = vmor %vm67, %vm68
    %v70 = vsel %vm69, %v61, %v66
    %v71 = vmul.f32 %v47, %v60
    %v72 = vmul.f32 %v48, %v70
    %v73 = vld [vmem:[%s1] sm:$0x1]
    %v75 = vperm.slane %v73, 0
    %v77 = vmul.f32 %v71, %v75
    %v78 = vmul.f32 %v72, %v75
    %v79 = vld [vmem:[%s2] sm:$0x1]
    %v81 = vperm.slane %v79, 0
    %v83 = vadd.f32 %v77, %v81
    %v84 = vadd.f32 %v78, %v81
    %v85 = vpack.c.bf16 %v84, %v83
    %v86 = vld [vmem:[%s3] sm:$0xff]
    %v87 = vld [vmem:[%s3 + $0x8] sm:$0xff]
    %v88 = vld [vmem:[%s3 + $0x10] sm:$0xff]
    %v89 = vld [vmem:[%s3 + $0x18] sm:$0xff]
    %v90 = vld [vmem:[%s3 + $0x20] sm:$0xff]
    %v91 = vld [vmem:[%s3 + $0x28] sm:$0xff]
    %v92 = vld [vmem:[%s3 + $0x30] sm:$0xff]
    %v93 = vld [vmem:[%s3 + $0x38] sm:$0xff]
    %v94 = vld [vmem:[%s3 + $0x40] sm:$0xff]
    %v95 = vld [vmem:[%s3 + $0x48] sm:$0xff]
    %v96 = vld [vmem:[%s3 + $0x50] sm:$0xff]
    %v97 = vld [vmem:[%s3 + $0x58] sm:$0xff]
    %v98 = vld [vmem:[%s3 + $0x60] sm:$0xff]
    %v99 = vld [vmem:[%s3 + $0x68] sm:$0xff]
    %v100 = vld [vmem:[%s3 + $0x70] sm:$0xff]
    %v101 = vld [vmem:[%s3 + $0x78] sm:$0xff]
    %v102 = vld [vmem:[%s3 + $0x80] sm:$0xff]
    %v103 = vld [vmem:[%s3 + $0x88] sm:$0xff]
    %v104 = vld [vmem:[%s3 + $0x90] sm:$0xff]
    %v105 = vld [vmem:[%s3 + $0x98] sm:$0xff]
    %v106 = vld [vmem:[%s3 + $0xa0] sm:$0xff]
    %v107 = vld [vmem:[%s3 + $0xa8] sm:$0xff]
    %v108 = vld [vmem:[%s3 + $0xb0] sm:$0xff]
    %v109 = vld [vmem:[%s3 + $0xb8] sm:$0xff]
    %v110 = vld [vmem:[%s3 + $0xc0] sm:$0xff]
    %v111 = vld [vmem:[%s3 + $0xc8] sm:$0xff]
    %v112 = vld [vmem:[%s3 + $0xd0] sm:$0xff]
    %v113 = vld [vmem:[%s3 + $0xd8] sm:$0xff]
    %v114 = vld [vmem:[%s3 + $0xe0] sm:$0xff]
    %v115 = vld [vmem:[%s3 + $0xe8] sm:$0xff]
    %v116 = vld [vmem:[%s3 + $0xf0] sm:$0xff]
    %v117 = vld [vmem:[%s3 + $0xf8] sm:$0xff]
    %v118 = vld [vmem:[%s4] sm:$0xf]
    %v120 = vperm.slane %v118, 0
    %v121 = vperm.slane %v118, 1
    %v122 = vperm.slane %v118, 2
    %v123 = vperm.slane %v118, 3
    %v160 = vunpack.c.l.b16 %v86
    %v161 = vunpack.c.h.b16 %v86
    %v162 = vunpack.c.l.b16 %v87
    %v163 = vunpack.c.h.b16 %v87
    %v164 = vunpack.c.l.b16 %v88
    %v165 = vunpack.c.h.b16 %v88
    %v166 = vunpack.c.l.b16 %v89
    %v167 = vunpack.c.h.b16 %v89
    %v168 = vunpack.c.l.b16 %v90
    %v169 = vunpack.c.h.b16 %v90
    %v170 = vunpack.c.l.b16 %v91
    %v171 = vunpack.c.h.b16 %v91
    %v172 = vunpack.c.l.b16 %v92
    %v173 = vunpack.c.h.b16 %v92
    %v174 = vunpack.c.l.b16 %v93
    %v175 = vunpack.c.h.b16 %v93
    %v176 = vunpack.c.l.b16 %v94
    %v177 = vunpack.c.h.b16 %v94
    %v178 = vunpack.c.l.b16 %v95
    %v179 = vunpack.c.h.b16 %v95
    %v180 = vunpack.c.l.b16 %v96
    %v181 = vunpack.c.h.b16 %v96
    %v182 = vunpack.c.l.b16 %v97
    %v183 = vunpack.c.h.b16 %v97
    %v184 = vunpack.c.l.b16 %v98
    %v185 = vunpack.c.h.b16 %v98
    %v186 = vunpack.c.l.b16 %v99
    %v187 = vunpack.c.h.b16 %v99
    %v188 = vunpack.c.l.b16 %v100
    %v189 = vunpack.c.h.b16 %v100
    %v190 = vunpack.c.l.b16 %v101
    %v191 = vunpack.c.h.b16 %v101
    %v192 = vunpack.c.l.b16 %v102
    %v193 = vunpack.c.h.b16 %v102
    %v194 = vunpack.c.l.b16 %v103
    %v195 = vunpack.c.h.b16 %v103
    %v196 = vunpack.c.l.b16 %v104
    %v197 = vunpack.c.h.b16 %v104
    %v198 = vunpack.c.l.b16 %v105
    %v199 = vunpack.c.h.b16 %v105
    %v200 = vunpack.c.l.b16 %v106
    %v201 = vunpack.c.h.b16 %v106
    %v202 = vunpack.c.l.b16 %v107
    %v203 = vunpack.c.h.b16 %v107
    %v204 = vunpack.c.l.b16 %v108
    %v205 = vunpack.c.h.b16 %v108
    %v206 = vunpack.c.l.b16 %v109
    %v207 = vunpack.c.h.b16 %v109
    %v208 = vunpack.c.l.b16 %v110
    %v209 = vunpack.c.h.b16 %v110
    %v210 = vunpack.c.l.b16 %v111
    %v211 = vunpack.c.h.b16 %v111
    %v212 = vunpack.c.l.b16 %v112
    %v213 = vunpack.c.h.b16 %v112
    %v214 = vunpack.c.l.b16 %v113
    %v215 = vunpack.c.h.b16 %v113
    %v216 = vunpack.c.l.b16 %v114
    %v217 = vunpack.c.h.b16 %v114
    %v218 = vunpack.c.l.b16 %v115
    %v219 = vunpack.c.h.b16 %v115
    %v220 = vunpack.c.l.b16 %v116
    %v221 = vunpack.c.h.b16 %v116
    %v222 = vunpack.c.l.b16 %v117
    %v223 = vunpack.c.h.b16 %v117
    %v224 = vpack.c.b16 %v164, %v160
    %v225 = vpack.c.b16 %v165, %v161
    %v226 = vpack.c.b16 %v166, %v162
    %v227 = vpack.c.b16 %v167, %v163
    %v228 = vpack.c.b16 %v172, %v168
    %v229 = vpack.c.b16 %v173, %v169
    %v230 = vpack.c.b16 %v174, %v170
    %v231 = vpack.c.b16 %v175, %v171
    %v232 = vpack.c.b16 %v180, %v176
    %v233 = vpack.c.b16 %v181, %v177
    %v234 = vpack.c.b16 %v182, %v178
    %v235 = vpack.c.b16 %v183, %v179
    %v236 = vpack.c.b16 %v188, %v184
    %v237 = vpack.c.b16 %v189, %v185
    %v238 = vpack.c.b16 %v190, %v186
    %v239 = vpack.c.b16 %v191, %v187
    %v240 = vpack.c.b16 %v196, %v192
    %v241 = vpack.c.b16 %v197, %v193
    %v242 = vpack.c.b16 %v198, %v194
    %v243 = vpack.c.b16 %v199, %v195
    %v244 = vpack.c.b16 %v204, %v200
    %v245 = vpack.c.b16 %v205, %v201
    %v246 = vpack.c.b16 %v206, %v202
    %v247 = vpack.c.b16 %v207, %v203
    %v248 = vpack.c.b16 %v212, %v208
    %v249 = vpack.c.b16 %v213, %v209
    %v250 = vpack.c.b16 %v214, %v210
    %v251 = vpack.c.b16 %v215, %v211
    %v252 = vpack.c.b16 %v220, %v216
    %v253 = vpack.c.b16 %v221, %v217
    %v254 = vpack.c.b16 %v222, %v218
    %v255 = vpack.c.b16 %v223, %v219
    %288 = vmatpush.bf16.msra.mxu0 %v252
    %289 = vmatpush.bf16.msra.mxu0 %v248
    %290 = vmatpush.bf16.msra.mxu0 %v244
    %291 = vmatpush.bf16.msra.mxu0 %v240
    %292 = vmatpush.bf16.msra.mxu0 %v236
    %293 = vmatpush.bf16.msra.mxu0 %v232
    %294 = vmatpush.bf16.msra.mxu0 %v228
    %295 = vmatpush.bf16.msra.mxu0 %v224
    %296 = vmatmul.bf16.gmra.mxu0 %v85
    %v297 = vpop.f32.mrf.mxu0
    %v298 = vadd.f32 %v120, %v297
    %v299 = vpop.f32.mrf.mxu0
    %v300 = vadd.f32 %v120, %v299
    %301 = vdwg.mxu0
    %302 = vmatpush.bf16.msra.mxu0 %v253
    %303 = vmatpush.bf16.msra.mxu0 %v249
    %304 = vmatpush.bf16.msra.mxu0 %v245
    %305 = vmatpush.bf16.msra.mxu0 %v241
    %306 = vmatpush.bf16.msra.mxu0 %v237
    %307 = vmatpush.bf16.msra.mxu0 %v233
    %308 = vmatpush.bf16.msra.mxu0 %v229
    %309 = vmatpush.bf16.msra.mxu0 %v225
    %310 = vmatmul.bf16.gmra.mxu0 %v85
    %v311 = vpop.f32.mrf.mxu0
    %v312 = vadd.f32 %v121, %v311
    %v313 = vpop.f32.mrf.mxu0
    %v314 = vadd.f32 %v121, %v313
    %315 = vdwg.mxu0
    %316 = vmatpush.bf16.msra.mxu0 %v254
    %317 = vmatpush.bf16.msra.mxu0 %v250
    %318 = vmatpush.bf16.msra.mxu0 %v246
    %319 = vmatpush.bf16.msra.mxu0 %v242
    %320 = vmatpush.bf16.msra.mxu0 %v238
    %321 = vmatpush.bf16.msra.mxu0 %v234
    %322 = vmatpush.bf16.msra.mxu0 %v230
    %323 = vmatpush.bf16.msra.mxu0 %v226
    %324 = vmatmul.bf16.gmra.mxu0 %v85
    %v325 = vpop.f32.mrf.mxu0
    %v326 = vadd.f32 %v122, %v325
    %v327 = vpop.f32.mrf.mxu0
    %v328 = vadd.f32 %v122, %v327
    %329 = vdwg.mxu0
    %330 = vmatpush.bf16.msra.mxu0 %v255
    %331 = vmatpush.bf16.msra.mxu0 %v251
    %332 = vmatpush.bf16.msra.mxu0 %v247
    %333 = vmatpush.bf16.msra.mxu0 %v243
    %334 = vmatpush.bf16.msra.mxu0 %v239
    %335 = vmatpush.bf16.msra.mxu0 %v235
    %336 = vmatpush.bf16.msra.mxu0 %v231
    %337 = vmatpush.bf16.msra.mxu0 %v227
    %338 = vmatmul.bf16.gmra.mxu0 %v85
    %v339 = vpop.f32.mrf.mxu0
    %v340 = vadd.f32 %v123, %v339
    %v341 = vpop.f32.mrf.mxu0
    %v342 = vadd.f32 %v123, %v341
    %343 = vdwg.mxu0
    %v344 = vmul.f32 %v298, 0.5
    %v345 = vmul.f32 %v312, 0.5
    %v346 = vmul.f32 %v326, 0.5
    %v347 = vmul.f32 %v340, 0.5
    %v348 = vmul.f32 %v300, 0.5
    %v349 = vmul.f32 %v314, 0.5
    %v350 = vmul.f32 %v328, 0.5
    %v351 = vmul.f32 %v342, 0.5
    %v352 = vmul.f32 %v298, 0.70710677
    %v353 = vmul.f32 %v312, 0.70710677
    %v354 = vmul.f32 %v326, 0.70710677
    %v355 = vmul.f32 %v340, 0.70710677
    %v356 = vmul.f32 %v300, 0.70710677
    %v357 = vmul.f32 %v314, 0.70710677
    %v358 = vmul.f32 %v328, 0.70710677
    %v359 = vmul.f32 %v342, 0.70710677
    %v360 = vmul.f32 %v352, %v352
    %v361 = vmin.f32 16.0, %v360
    %v362 = vmul.f32 %v361, 2.1237322e-06
    %v363 = vadd.f32 %v362, 0.00028619796
    %v364 = vmul.f32 %v361, %v363
    %v365 = vadd.f32 %v364, 0.0036580483
    %v366 = vmul.f32 %v361, %v365
    %v367 = vadd.f32 %v366, 0.05243302
    %v368 = vmul.f32 %v361, %v367
    %v369 = vadd.f32 %v368, 0.18741608
    %v370 = vmul.f32 %v361, %v369
    %v371 = vadd.f32 %v370, 1.1283791
    %v372 = vmul.f32 %v352, %v371
    %v373 = vmul.f32 %v361, 3.8918573e-05
    %v374 = vadd.f32 %v373, 0.001143296
    %v375 = vmul.f32 %v361, %v374
    %v376 = vadd.f32 %v375, 0.014752088
    %v377 = vmul.f32 %v361, %v376
    %v378 = vadd.f32 %v377, 0.112945676
    %v379 = vmul.f32 %v361, %v378
    %v380 = vadd.f32 %v379, 0.4994258
    %v381 = vmul.f32 %v361, %v380
    %v382 = vadd.f32 %v381, 1.0
    %v383 = vrcp.pop %v382
    %v384 = vmul.f32 %v382, %v383
    %v385 = vsub.f32 1.0, %v384
    %v386 = vmul.f32 %v383, %v385
    %v387 = vadd.f32 %v383, %v386
    %vm388 = vweird.f32 %v382
    %vm389 = vweird.f32 %v383
    %vm390 = vmor %vm388, %vm389
    %v391 = vsel %vm390, %v383, %v387
    %v392 = vand.u32 2147483647, %v382
    %vm393 = vcmp.eq.f32.partialorder %v392, 8.507059e+37
    %v394 = vand.u32 %v382, 2147483648
    %v395 = vor.u32 1.1754944e-38, %v394
    %v396 = vsel %vm393, %v395, %v391
    %v397 = vmul.f32 %v372, %v396
    %v398 = vmin.f32 %v397, 1.0
    %v399 = vmax.f32 %v398, -1.0
    %v400 = vmul.f32 %v353, %v353
    %v401 = vmin.f32 16.0, %v400
    %v402 = vmul.f32 %v401, 2.1237322e-06
    %v403 = vadd.f32 %v402, 0.00028619796
    %v404 = vmul.f32 %v401, %v403
    %v405 = vadd.f32 %v404, 0.0036580483
    %v406 = vmul.f32 %v401, %v405
    %v407 = vadd.f32 %v406, 0.05243302
    %v408 = vmul.f32 %v401, %v407
    %v409 = vadd.f32 %v408, 0.18741608
    %v410 = vmul.f32 %v401, %v409
    %v411 = vadd.f32 %v410, 1.1283791
    %v412 = vmul.f32 %v353, %v411
    %v413 = vmul.f32 %v401, 3.8918573e-05
    %v414 = vadd.f32 %v413, 0.001143296
    %v415 = vmul.f32 %v401, %v414
    %v416 = vadd.f32 %v415, 0.014752088
    %v417 = vmul.f32 %v401, %v416
    %v418 = vadd.f32 %v417, 0.112945676
    %v419 = vmul.f32 %v401, %v418
    %v420 = vadd.f32 %v419, 0.4994258
    %v421 = vmul.f32 %v401, %v420
    %v422 = vadd.f32 %v421, 1.0
    %v423 = vrcp.pop %v422
    %v424 = vmul.f32 %v422, %v423
    %v425 = vsub.f32 1.0, %v424
    %v426 = vmul.f32 %v423, %v425
    %v427 = vadd.f32 %v423, %v426
    %vm428 = vweird.f32 %v422
    %vm429 = vweird.f32 %v423
    %vm430 = vmor %vm428, %vm429
    %v431 = vsel %vm430, %v423, %v427
    %v432 = vand.u32 2147483647, %v422
    %vm433 = vcmp.eq.f32.partialorder %v432, 8.507059e+37
    %v434 = vand.u32 %v422, 2147483648
    %v435 = vor.u32 1.1754944e-38, %v434
    %v436 = vsel %vm433, %v435, %v431
    %v437 = vmul.f32 %v412, %v436
    %v438 = vmin.f32 %v437, 1.0
    %v439 = vmax.f32 %v438, -1.0
    %v440 = vmul.f32 %v354, %v354
    %v441 = vmin.f32 16.0, %v440
    %v442 = vmul.f32 %v441, 2.1237322e-06
    %v443 = vadd.f32 %v442, 0.00028619796
    %v444 = vmul.f32 %v441, %v443
    %v445 = vadd.f32 %v444, 0.0036580483
    %v446 = vmul.f32 %v441, %v445
    %v447 = vadd.f32 %v446, 0.05243302
    %v448 = vmul.f32 %v441, %v447
    %v449 = vadd.f32 %v448, 0.18741608
    %v450 = vmul.f32 %v441, %v449
    %v451 = vadd.f32 %v450, 1.1283791
    %v452 = vmul.f32 %v354, %v451
    %v453 = vmul.f32 %v441, 3.8918573e-05
    %v454 = vadd.f32 %v453, 0.001143296
    %v455 = vmul.f32 %v441, %v454
    %v456 = vadd.f32 %v455, 0.014752088
    %v457 = vmul.f32 %v441, %v456
    %v458 = vadd.f32 %v457, 0.112945676
    %v459 = vmul.f32 %v441, %v458
    %v460 = vadd.f32 %v459, 0.4994258
    %v461 = vmul.f32 %v441, %v460
    %v462 = vadd.f32 %v461, 1.0
    %v463 = vrcp.pop %v462
    %v464 = vmul.f32 %v462, %v463
    %v465 = vsub.f32 1.0, %v464
    %v466 = vmul.f32 %v463, %v465
    %v467 = vadd.f32 %v463, %v466
    %vm468 = vweird.f32 %v462
    %vm469 = vweird.f32 %v463
    %vm470 = vmor %vm468, %vm469
    %v471 = vsel %vm470, %v463, %v467
    %v472 = vand.u32 2147483647, %v462
    %vm473 = vcmp.eq.f32.partialorder %v472, 8.507059e+37
    %v474 = vand.u32 %v462, 2147483648
    %v475 = vor.u32 1.1754944e-38, %v474
    %v476 = vsel %vm473, %v475, %v471
    %v477 = vmul.f32 %v452, %v476
    %v478 = vmin.f32 %v477, 1.0
    %v479 = vmax.f32 %v478, -1.0
    %v480 = vmul.f32 %v355, %v355
    %v481 = vmin.f32 16.0, %v480
    %v482 = vmul.f32 %v481, 2.1237322e-06
    %v483 = vadd.f32 %v482, 0.00028619796
    %v484 = vmul.f32 %v481, %v483
    %v485 = vadd.f32 %v484, 0.0036580483
    %v486 = vmul.f32 %v481, %v485
    %v487 = vadd.f32 %v486, 0.05243302
    %v488 = vmul.f32 %v481, %v487
    %v489 = vadd.f32 %v488, 0.18741608
    %v490 = vmul.f32 %v481, %v489
    %v491 = vadd.f32 %v490, 1.1283791
    %v492 = vmul.f32 %v355, %v491
    %v493 = vmul.f32 %v481, 3.8918573e-05
    %v494 = vadd.f32 %v493, 0.001143296
    %v495 = vmul.f32 %v481, %v494
    %v496 = vadd.f32 %v495, 0.014752088
    %v497 = vmul.f32 %v481, %v496
    %v498 = vadd.f32 %v497, 0.112945676
    %v499 = vmul.f32 %v481, %v498
    %v500 = vadd.f32 %v499, 0.4994258
    %v501 = vmul.f32 %v481, %v500
    %v502 = vadd.f32 %v501, 1.0
    %v503 = vrcp.pop %v502
    %v504 = vmul.f32 %v502, %v503
    %v505 = vsub.f32 1.0, %v504
    %v506 = vmul.f32 %v503, %v505
    %v507 = vadd.f32 %v503, %v506
    %vm508 = vweird.f32 %v502
    %vm509 = vweird.f32 %v503
    %vm510 = vmor %vm508, %vm509
    %v511 = vsel %vm510, %v503, %v507
    %v512 = vand.u32 2147483647, %v502
    %vm513 = vcmp.eq.f32.partialorder %v512, 8.507059e+37
    %v514 = vand.u32 %v502, 2147483648
    %v515 = vor.u32 1.1754944e-38, %v514
    %v516 = vsel %vm513, %v515, %v511
    %v517 = vmul.f32 %v492, %v516
    %v518 = vmin.f32 %v517, 1.0
    %v519 = vmax.f32 %v518, -1.0
    %v520 = vmul.f32 %v356, %v356
    %v521 = vmin.f32 16.0, %v520
    %v522 = vmul.f32 %v521, 2.1237322e-06
    %v523 = vadd.f32 %v522, 0.00028619796
    %v524 = vmul.f32 %v521, %v523
    %v525 = vadd.f32 %v524, 0.0036580483
    %v526 = vmul.f32 %v521, %v525
    %v527 = vadd.f32 %v526, 0.05243302
    %v528 = vmul.f32 %v521, %v527
    %v529 = vadd.f32 %v528, 0.18741608
    %v530 = vmul.f32 %v521, %v529
    %v531 = vadd.f32 %v530, 1.1283791
    %v532 = vmul.f32 %v356, %v531
    %v533 = vmul.f32 %v521, 3.8918573e-05
    %v534 = vadd.f32 %v533, 0.001143296
    %v535 = vmul.f32 %v521, %v534
    %v536 = vadd.f32 %v535, 0.014752088
    %v537 = vmul.f32 %v521, %v536
    %v538 = vadd.f32 %v537, 0.112945676
    %v539 = vmul.f32 %v521, %v538
    %v540 = vadd.f32 %v539, 0.4994258
    %v541 = vmul.f32 %v521, %v540
    %v542 = vadd.f32 %v541, 1.0
    %v543 = vrcp.pop %v542
    %v544 = vmul.f32 %v542, %v543
    %v545 = vsub.f32 1.0, %v544
    %v546 = vmul.f32 %v543, %v545
    %v547 = vadd.f32 %v543, %v546
    %vm548 = vweird.f32 %v542
    %vm549 = vweird.f32 %v543
    %vm550 = vmor %vm548, %vm549
    %v551 = vsel %vm550, %v543, %v547
    %v552 = vand.u32 2147483647, %v542
    %vm553 = vcmp.eq.f32.partialorder %v552, 8.507059e+37
    %v554 = vand.u32 %v542, 2147483648
    %v555 = vor.u32 1.1754944e-38, %v554
    %v556 = vsel %vm553, %v555, %v551
    %v557 = vmul.f32 %v532, %v556
    %v558 = vmin.f32 %v557, 1.0
    %v559 = vmax.f32 %v558, -1.0
    %v560 = vmul.f32 %v357, %v357
    %v561 = vmin.f32 16.0, %v560
    %v562 = vmul.f32 %v561, 2.1237322e-06
    %v563 = vadd.f32 %v562, 0.00028619796
    %v564 = vmul.f32 %v561, %v563
    %v565 = vadd.f32 %v564, 0.0036580483
    %v566 = vmul.f32 %v561, %v565
    %v567 = vadd.f32 %v566, 0.05243302
    %v568 = vmul.f32 %v561, %v567
    %v569 = vadd.f32 %v568, 0.18741608
    %v570 = vmul.f32 %v561, %v569
    %v571 = vadd.f32 %v570, 1.1283791
    %v572 = vmul.f32 %v357, %v571
    %v573 = vmul.f32 %v561, 3.8918573e-05
    %v574 = vadd.f32 %v573, 0.001143296
    %v575 = vmul.f32 %v561, %v574
    %v576 = vadd.f32 %v575, 0.014752088
    %v577 = vmul.f32 %v561, %v576
    %v578 = vadd.f32 %v577, 0.112945676
    %v579 = vmul.f32 %v561, %v578
    %v580 = vadd.f32 %v579, 0.4994258
    %v581 = vmul.f32 %v561, %v580
    %v582 = vadd.f32 %v581, 1.0
    %v583 = vrcp.pop %v582
    %v584 = vmul.f32 %v582, %v583
    %v585 = vsub.f32 1.0, %v584
    %v586 = vmul.f32 %v583, %v585
    %v587 = vadd.f32 %v583, %v586
    %vm588 = vweird.f32 %v582
    %vm589 = vweird.f32 %v583
    %vm590 = vmor %vm588, %vm589
    %v591 = vsel %vm590, %v583, %v587
    %v592 = vand.u32 2147483647, %v582
    %vm593 = vcmp.eq.f32.partialorder %v592, 8.507059e+37
    %v594 = vand.u32 %v582, 2147483648
    %v595 = vor.u32 1.1754944e-38, %v594
    %v596 = vsel %vm593, %v595, %v591
    %v597 = vmul.f32 %v572, %v596
    %v598 = vmin.f32 %v597, 1.0
    %v599 = vmax.f32 %v598, -1.0
    %v600 = vmul.f32 %v358, %v358
    %v601 = vmin.f32 16.0, %v600
    %v602 = vmul.f32 %v601, 2.1237322e-06
    %v603 = vadd.f32 %v602, 0.00028619796
    %v604 = vmul.f32 %v601, %v603
    %v605 = vadd.f32 %v604, 0.0036580483
    %v606 = vmul.f32 %v601, %v605
    %v607 = vadd.f32 %v606, 0.05243302
    %v608 = vmul.f32 %v601, %v607
    %v609 = vadd.f32 %v608, 0.18741608
    %v610 = vmul.f32 %v601, %v609
    %v611 = vadd.f32 %v610, 1.1283791
    %v612 = vmul.f32 %v358, %v611
    %v613 = vmul.f32 %v601, 3.8918573e-05
    %v614 = vadd.f32 %v613, 0.001143296
    %v615 = vmul.f32 %v601, %v614
    %v616 = vadd.f32 %v615, 0.014752088
    %v617 = vmul.f32 %v601, %v616
    %v618 = vadd.f32 %v617, 0.112945676
    %v619 = vmul.f32 %v601, %v618
    %v620 = vadd.f32 %v619, 0.4994258
    %v621 = vmul.f32 %v601, %v620
    %v622 = vadd.f32 %v621, 1.0
    %v623 = vrcp.pop %v622
    %v624 = vmul.f32 %v622, %v623
    %v625 = vsub.f32 1.0, %v624
    %v626 = vmul.f32 %v623, %v625
    %v627 = vadd.f32 %v623, %v626
    %vm628 = vweird.f32 %v622
    %vm629 = vweird.f32 %v623
    %vm630 = vmor %vm628, %vm629
    %v631 = vsel %vm630, %v623, %v627
    %v632 = vand.u32 2147483647, %v622
    %vm633 = vcmp.eq.f32.partialorder %v632, 8.507059e+37
    %v634 = vand.u32 %v622, 2147483648
    %v635 = vor.u32 1.1754944e-38, %v634
    %v636 = vsel %vm633, %v635, %v631
    %v637 = vmul.f32 %v612, %v636
    %v638 = vmin.f32 %v637, 1.0
    %v639 = vmax.f32 %v638, -1.0
    %v640 = vmul.f32 %v359, %v359
    %v641 = vmin.f32 16.0, %v640
    %v642 = vmul.f32 %v641, 2.1237322e-06
    %v643 = vadd.f32 %v642, 0.00028619796
    %v644 = vmul.f32 %v641, %v643
    %v645 = vadd.f32 %v644, 0.0036580483
    %v646 = vmul.f32 %v641, %v645
    %v647 = vadd.f32 %v646, 0.05243302
    %v648 = vmul.f32 %v641, %v647
    %v649 = vadd.f32 %v648, 0.18741608
    %v650 = vmul.f32 %v641, %v649
    %v651 = vadd.f32 %v650, 1.1283791
    %v652 = vmul.f32 %v359, %v651
    %v653 = vmul.f32 %v641, 3.8918573e-05
    %v654 = vadd.f32 %v653, 0.001143296
    %v655 = vmul.f32 %v641, %v654
    %v656 = vadd.f32 %v655, 0.014752088
    %v657 = vmul.f32 %v641, %v656
    %v658 = vadd.f32 %v657, 0.112945676
    %v659 = vmul.f32 %v641, %v658
    %v660 = vadd.f32 %v659, 0.4994258
    %v661 = vmul.f32 %v641, %v660
    %v662 = vadd.f32 %v661, 1.0
    %v663 = vrcp.pop %v662
    %v664 = vmul.f32 %v662, %v663
    %v665 = vsub.f32 1.0, %v664
    %v666 = vmul.f32 %v663, %v665
    %v667 = vadd.f32 %v663, %v666
    %vm668 = vweird.f32 %v662
    %vm669 = vweird.f32 %v663
    %vm670 = vmor %vm668, %vm669
    %v671 = vsel %vm670, %v663, %v667
    %v672 = vand.u32 2147483647, %v662
    %vm673 = vcmp.eq.f32.partialorder %v672, 8.507059e+37
    %v674 = vand.u32 %v662, 2147483648
    %v675 = vor.u32 1.1754944e-38, %v674
    %v676 = vsel %vm673, %v675, %v671
    %v677 = vmul.f32 %v652, %v676
    %v678 = vmin.f32 %v677, 1.0
    %v679 = vmax.f32 %v678, -1.0
    %v680 = vadd.f32 %v399, 1.0
    %v681 = vadd.f32 %v439, 1.0
    %v682 = vadd.f32 %v479, 1.0
    %v683 = vadd.f32 %v519, 1.0
    %v684 = vadd.f32 %v559, 1.0
    %v685 = vadd.f32 %v599, 1.0
    %v686 = vadd.f32 %v639, 1.0
    %v687 = vadd.f32 %v679, 1.0
    %v688 = vmul.f32 %v344, %v680
    %v689 = vmul.f32 %v345, %v681
    %v690 = vmul.f32 %v346, %v682
    %v691 = vmul.f32 %v347, %v683
    %v692 = vmul.f32 %v348, %v684
    %v693 = vmul.f32 %v349, %v685
    %v694 = vmul.f32 %v350, %v686
    %v695 = vmul.f32 %v351, %v687
    %v696 = vpack.c.bf16 %v692, %v688
    %v697 = vpack.c.bf16 %v693, %v689
    %v698 = vpack.c.bf16 %v694, %v690
    %v699 = vpack.c.bf16 %v695, %v691
    %v700 = vld [vmem:[%s5] sm:$0xf]
    %v701 = vld [vmem:[%s5 + $0x4] sm:$0xf]
    %v702 = vld [vmem:[%s5 + $0x8] sm:$0xf]
    %v703 = vld [vmem:[%s5 + $0xc] sm:$0xf]
    %v704 = vld [vmem:[%s5 + $0x10] sm:$0xf]
    %v705 = vld [vmem:[%s5 + $0x14] sm:$0xf]
    %v706 = vld [vmem:[%s5 + $0x18] sm:$0xf]
    %v707 = vld [vmem:[%s5 + $0x1c] sm:$0xf]
    %v708 = vld [vmem:[%s5 + $0x20] sm:$0xf]
    %v709 = vld [vmem:[%s5 + $0x24] sm:$0xf]
    %v710 = vld [vmem:[%s5 + $0x28] sm:$0xf]
    %v711 = vld [vmem:[%s5 + $0x2c] sm:$0xf]
    %v712 = vld [vmem:[%s5 + $0x30] sm:$0xf]
    %v713 = vld [vmem:[%s5 + $0x34] sm:$0xf]
    %v714 = vld [vmem:[%s5 + $0x38] sm:$0xf]
    %v715 = vld [vmem:[%s5 + $0x3c] sm:$0xf]
    %v716 = vld [vmem:[%s5 + $0x40] sm:$0xf]
    %v717 = vld [vmem:[%s5 + $0x44] sm:$0xf]
    %v718 = vld [vmem:[%s5 + $0x48] sm:$0xf]
    %v719 = vld [vmem:[%s5 + $0x4c] sm:$0xf]
    %v720 = vld [vmem:[%s5 + $0x50] sm:$0xf]
    %v721 = vld [vmem:[%s5 + $0x54] sm:$0xf]
    %v722 = vld [vmem:[%s5 + $0x58] sm:$0xf]
    %v723 = vld [vmem:[%s5 + $0x5c] sm:$0xf]
    %v724 = vld [vmem:[%s5 + $0x60] sm:$0xf]
    %v725 = vld [vmem:[%s5 + $0x64] sm:$0xf]
    %v726 = vld [vmem:[%s5 + $0x68] sm:$0xf]
    %v727 = vld [vmem:[%s5 + $0x6c] sm:$0xf]
    %v728 = vld [vmem:[%s5 + $0x70] sm:$0xf]
    %v729 = vld [vmem:[%s5 + $0x74] sm:$0xf]
    %v730 = vld [vmem:[%s5 + $0x78] sm:$0xf]
    %v731 = vld [vmem:[%s5 + $0x7c] sm:$0xf]
    %v732 = vld [vmem:[%s5 + $0x80] sm:$0xf]
    %v733 = vld [vmem:[%s5 + $0x84] sm:$0xf]
    %v734 = vld [vmem:[%s5 + $0x88] sm:$0xf]
    %v735 = vld [vmem:[%s5 + $0x8c] sm:$0xf]
    %v736 = vld [vmem:[%s5 + $0x90] sm:$0xf]
    %v737 = vld [vmem:[%s5 + $0x94] sm:$0xf]
    %v738 = vld [vmem:[%s5 + $0x98] sm:$0xf]
    %v739 = vld [vmem:[%s5 + $0x9c] sm:$0xf]
    %v740 = vld [vmem:[%s5 + $0xa0] sm:$0xf]
    %v741 = vld [vmem:[%s5 + $0xa4] sm:$0xf]
    %v742 = vld [vmem:[%s5 + $0xa8] sm:$0xf]
    %v743 = vld [vmem:[%s5 + $0xac] sm:$0xf]
    %v744 = vld [vmem:[%s5 + $0xb0] sm:$0xf]
    %v745 = vld [vmem:[%s5 + $0xb4] sm:$0xf]
    %v746 = vld [vmem:[%s5 + $0xb8] sm:$0xf]
    %v747 = vld [vmem:[%s5 + $0xbc] sm:$0xf]
    %v748 = vld [vmem:[%s5 + $0xc0] sm:$0xf]
    %v749 = vld [vmem:[%s5 + $0xc4] sm:$0xf]
    %v750 = vld [vmem:[%s5 + $0xc8] sm:$0xf]
    %v751 = vld [vmem:[%s5 + $0xcc] sm:$0xf]
    %v752 = vld [vmem:[%s5 + $0xd0] sm:$0xf]
    %v753 = vld [vmem:[%s5 + $0xd4] sm:$0xf]
    %v754 = vld [vmem:[%s5 + $0xd8] sm:$0xf]
    %v755 = vld [vmem:[%s5 + $0xdc] sm:$0xf]
    %v756 = vld [vmem:[%s5 + $0xe0] sm:$0xf]
    %v757 = vld [vmem:[%s5 + $0xe4] sm:$0xf]
    %v758 = vld [vmem:[%s5 + $0xe8] sm:$0xf]
    %v759 = vld [vmem:[%s5 + $0xec] sm:$0xf]
    %v760 = vld [vmem:[%s5 + $0xf0] sm:$0xf]
    %v761 = vld [vmem:[%s5 + $0xf4] sm:$0xf]
    %v762 = vld [vmem:[%s5 + $0xf8] sm:$0xf]
    %v763 = vld [vmem:[%s5 + $0xfc] sm:$0xf]
    %v764 = vld [vmem:[%s6] sm:$0x1]
    %v766 = vperm.slane %v764, 0
    %v832 = vunpack.c.l.b16 %v700
    %v833 = vunpack.c.l.b16 %v701
    %v834 = vunpack.c.l.b16 %v702
    %v835 = vunpack.c.l.b16 %v703
    %v836 = vunpack.c.l.b16 %v704
    %v837 = vunpack.c.l.b16 %v705
    %v838 = vunpack.c.l.b16 %v706
    %v839 = vunpack.c.l.b16 %v707
    %v840 = vunpack.c.l.b16 %v708
    %v841 = vunpack.c.l.b16 %v709
    %v842 = vunpack.c.l.b16 %v710
    %v843 = vunpack.c.l.b16 %v711
    %v844 = vunpack.c.l.b16 %v712
    %v845 = vunpack.c.l.b16 %v713
    %v846 = vunpack.c.l.b16 %v714
    %v847 = vunpack.c.l.b16 %v715
    %v848 = vunpack.c.l.b16 %v716
    %v849 = vunpack.c.l.b16 %v717
    %v850 = vunpack.c.l.b16 %v718
    %v851 = vunpack.c.l.b16 %v719
    %v852 = vunpack.c.l.b16 %v720
    %v853 = vunpack.c.l.b16 %v721
    %v854 = vunpack.c.l.b16 %v722
    %v855 = vunpack.c.l.b16 %v723
    %v856 = vunpack.c.l.b16 %v724
    %v857 = vunpack.c.l.b16 %v725
    %v858 = vunpack.c.l.b16 %v726
    %v859 = vunpack.c.l.b16 %v727
    %v860 = vunpack.c.l.b16 %v728
    %v861 = vunpack.c.l.b16 %v729
    %v862 = vunpack.c.l.b16 %v730
    %v863 = vunpack.c.l.b16 %v731
    %v864 = vunpack.c.l.b16 %v732
    %v865 = vunpack.c.l.b16 %v733
    %v866 = vunpack.c.l.b16 %v734
    %v867 = vunpack.c.l.b16 %v735
    %v868 = vunpack.c.l.b16 %v736
    %v869 = vunpack.c.l.b16 %v737
    %v870 = vunpack.c.l.b16 %v738
    %v871 = vunpack.c.l.b16 %v739
    %v872 = vunpack.c.l.b16 %v740
    %v873 = vunpack.c.l.b16 %v741
    %v874 = vunpack.c.l.b16 %v742
    %v875 = vunpack.c.l.b16 %v743
    %v876 = vunpack.c.l.b16 %v744
    %v877 = vunpack.c.l.b16 %v745
    %v878 = vunpack.c.l.b16 %v746
    %v879 = vunpack.c.l.b16 %v747
    %v880 = vunpack.c.l.b16 %v748
    %v881 = vunpack.c.l.b16 %v749
    %v882 = vunpack.c.l.b16 %v750
    %v883 = vunpack.c.l.b16 %v751
    %v884 = vunpack.c.l.b16 %v752
    %v885 = vunpack.c.l.b16 %v753
    %v886 = vunpack.c.l.b16 %v754
    %v887 = vunpack.c.l.b16 %v755
    %v888 = vunpack.c.l.b16 %v756
    %v889 = vunpack.c.l.b16 %v757
    %v890 = vunpack.c.l.b16 %v758
    %v891 = vunpack.c.l.b16 %v759
    %v892 = vunpack.c.l.b16 %v760
    %v893 = vunpack.c.l.b16 %v761
    %v894 = vunpack.c.l.b16 %v762
    %v895 = vunpack.c.l.b16 %v763
    %v896 = vpack.c.b16 %v833, %v832
    %v897 = vpack.c.b16 %v835, %v834
    %v898 = vpack.c.b16 %v837, %v836
    %v899 = vpack.c.b16 %v839, %v838
    %v900 = vpack.c.b16 %v841, %v840
    %v901 = vpack.c.b16 %v843, %v842
    %v902 = vpack.c.b16 %v845, %v844
    %v903 = vpack.c.b16 %v847, %v846
    %v904 = vpack.c.b16 %v849, %v848
    %v905 = vpack.c.b16 %v851, %v850
    %v906 = vpack.c.b16 %v853, %v852
    %v907 = vpack.c.b16 %v855, %v854
    %v908 = vpack.c.b16 %v857, %v856
    %v909 = vpack.c.b16 %v859, %v858
    %v910 = vpack.c.b16 %v861, %v860
    %v911 = vpack.c.b16 %v863, %v862
    %v912 = vpack.c.b16 %v865, %v864
    %v913 = vpack.c.b16 %v867, %v866
    %v914 = vpack.c.b16 %v869, %v868
    %v915 = vpack.c.b16 %v871, %v870
    %v916 = vpack.c.b16 %v873, %v872
    %v917 = vpack.c.b16 %v875, %v874
    %v918 = vpack.c.b16 %v877, %v876
    %v919 = vpack.c.b16 %v879, %v878
    %v920 = vpack.c.b16 %v881, %v880
    %v921 = vpack.c.b16 %v883, %v882
    %v922 = vpack.c.b16 %v885, %v884
    %v923 = vpack.c.b16 %v887, %v886
    %v924 = vpack.c.b16 %v889, %v888
    %v925 = vpack.c.b16 %v891, %v890
    %v926 = vpack.c.b16 %v893, %v892
    %v927 = vpack.c.b16 %v895, %v894
    %960 = vmatpush.bf16.msra.mxu0 %v903
    %961 = vmatpush.bf16.msra.mxu0 %v902
    %962 = vmatpush.bf16.msra.mxu0 %v901
    %963 = vmatpush.bf16.msra.mxu0 %v900
    %964 = vmatpush.bf16.msra.mxu0 %v899
    %965 = vmatpush.bf16.msra.mxu0 %v898
    %966 = vmatpush.bf16.msra.mxu0 %v897
    %967 = vmatpush.bf16.msra.mxu0 %v896
    %968 = vmatmul.bf16.gmra.mxu0 %v696
    %v969 = vpop.f32.mrf.mxu0
    %v970 = vadd.f32 %v766, %v969
    %v971 = vpop.f32.mrf.mxu0
    %v972 = vadd.f32 %v766, %v971
    %973 = vdwg.mxu0
    %974 = vmatpush.bf16.msra.mxu0 %v911
    %975 = vmatpush.bf16.msra.mxu0 %v910
    %976 = vmatpush.bf16.msra.mxu0 %v909
    %977 = vmatpush.bf16.msra.mxu0 %v908
    %978 = vmatpush.bf16.msra.mxu0 %v907
    %979 = vmatpush.bf16.msra.mxu0 %v906
    %980 = vmatpush.bf16.msra.mxu0 %v905
    %981 = vmatpush.bf16.msra.mxu0 %v904
    %982 = vmatmul.bf16.gmra.mxu0 %v697
    %v983 = vpop.f32.mrf.mxu0
    %v984 = vadd.f32 %v970, %v983
    %v985 = vpop.f32.mrf.mxu0
    %v986 = vadd.f32 %v972, %v985
    %987 = vdwg.mxu0
    %988 = vmatpush.bf16.msra.mxu0 %v919
    %989 = vmatpush.bf16.msra.mxu0 %v918
    %990 = vmatpush.bf16.msra.mxu0 %v917
    %991 = vmatpush.bf16.msra.mxu0 %v916
    %992 = vmatpush.bf16.msra.mxu0 %v915
    %993 = vmatpush.bf16.msra.mxu0 %v914
    %994 = vmatpush.bf16.msra.mxu0 %v913
    %995 = vmatpush.bf16.msra.mxu0 %v912
    %996 = vmatmul.bf16.gmra.mxu0 %v698
    %v997 = vpop.f32.mrf.mxu0
    %v998 = vadd.f32 %v984, %v997
    %v999 = vpop.f32.mrf.mxu0
    %v1000 = vadd.f32 %v986, %v999
    %1001 = vdwg.mxu0
    %1002 = vmatpush.bf16.msra.mxu0 %v927
    %1003 = vmatpush.bf16.msra.mxu0 %v926
    %1004 = vmatpush.bf16.msra.mxu0 %v925
    %1005 = vmatpush.bf16.msra.mxu0 %v924
    %1006 = vmatpush.bf16.msra.mxu0 %v923
    %1007 = vmatpush.bf16.msra.mxu0 %v922
    %1008 = vmatpush.bf16.msra.mxu0 %v921
    %1009 = vmatpush.bf16.msra.mxu0 %v920
    %1010 = vmatmul.bf16.gmra.mxu0 %v699
    %v1011 = vpop.f32.mrf.mxu0
    %v1012 = vadd.f32 %v998, %v1011
    %v1013 = vpop.f32.mrf.mxu0
    %v1014 = vadd.f32 %v1000, %v1013
    %1015 = vdwg.mxu0
    %v1016 = vadd.f32 %v27, %v1012
    %v1017 = vadd.f32 %v28, %v1014
    %1018 = vst [vmem:[#allocation2] sm:$0xff] %v1016
    %1019 = vst [vmem:[#allocation2 + $0x8] sm:$0xff] %v1017
    // Predicated region
    $region30: #{mlp_block.1} parent=1 // pred_check
      _
    $region31: #{mlp_block.1} parent=1 // pred_check_branch
      %1021 = sbr.rel (0) target = $region33
    $region32: #{mlp_block.1} parent=1 // pred_region
      %1023 = vsyncadd [#allocation3], 0
      %s1024 = sshll.u32 [#allocation2], 4
      %s1025 = int_to_ptr.vmem [resolvable:$true] %s1024
      %s1026 = sshll.u32 %s7, 4
      %s1027 = int_to_ptr.hbm [resolvable:$true] %s1026
      %1032 = dma.vmem_to_hbm [thread:$0]  %s1025, 256, %s1027, [#allocation3], 128, 128, 8
    $region33: #{mlp_block.1} parent=1 // pred_fallthru
      _
    // Predicated region
    $region34: #{mlp_block.1} parent=1 // pred_check
      _
    $region35: #{mlp_block.1} parent=1 // pred_check_branch
      %1034 = sbr.rel (0) target = $region37
    $region36: #{mlp_block.1} parent=1 // pred_region
      %1036 = dma.done [#allocation3], 256
    $region37: #{mlp_block.1} parent=1 // pred_fallthru
      _
    %1037 = vsyncpa [#allocation3], 1

</llo_original>
